<compile_context>
chip_gen: v5e
topology: v5e:2x2
jax: 0.10.0
libtpu: 0.0.40
codegen_flags: <defaults>
</compile_context>

<pallas_src>
import functools

import jax
import jax.numpy as jnp
from jax.experimental import pallas as pl
from jax.experimental.pallas import tpu as pltpu

# Max batch tile.  The dominant in-kernel temporary is the (TILE*TILE, BC) f32
# pairwise slab = TILE^2 * BC * 4 bytes; TILE=64 keeps it ~4 MiB (BC=256) so all
# temporaries fit the 32 MiB scoped-VMEM default on every generation incl. v7x.
# TODO(synk): bump to 128 (with a raised vmem_limit_bytes) on v5e/v6e if compute-bound.
_MAX_TILE = 64


def _round_up(x, m):
    return (x + m - 1) // m * m


def _project_kernel(x_ref, t_ref, m_ref):
    # M = x @ T on the MXU, f32 accumulation.  HIGHEST precision so the
    # downstream |.| / exp(-dist) chain matches the f32 reference.
    m_ref[...] = jnp.dot(x_ref[...], t_ref[...],
                         preferred_element_type=jnp.float32,
                         precision=jax.lax.Precision.HIGHEST)


def _pairwise_kernel(mi_ref, mj_ref, o_ref, acc_ref, *,
                     B_dim, C_dim, n_valid, n_total):
    # mi_ref: (TI, BC) rows this output tile, mj_ref: (TJ, BC) rows being reduced,
    # o_ref: (TI, B_dim), acc_ref: (TI, B_dim) f32 scratch (resident across j).
    j = pl.program_id(1)

    @pl.when(j == 0)
    def _():
        acc_ref[...] = jnp.zeros_like(acc_ref)

    mi = mi_ref[...]                                   # (TI, BC) f32
    mj = mj_ref[...]                                   # (TJ, BC) f32
    ti, bc = mi.shape
    tj = mj.shape[0]

    # All-pairs |M_j - M_i| in one shot: (TJ, TI, BC) -> tall 2-D (TJ*TI, BC).
    # (j on the leading axis so the later j-reduction is a cheap leading-dim sum.)
    absdiff = jnp.abs(mj[:, None, :] - mi[None, :, :]).reshape(tj * ti, bc)

    # 0/1 block-sum matrix S[k, b] = 1 iff b*C_dim <= k < (b+1)*C_dim, built
    # in-register (no input DMA); group-sum over the C_dim lanes runs on the MXU.
    kk = jax.lax.broadcasted_iota(jnp.int32, (bc, B_dim), 0)
    bb = jax.lax.broadcasted_iota(jnp.int32, (bc, B_dim), 1)
    lo = bb * C_dim
    s = ((kk >= lo) & (kk < lo + C_dim)).astype(absdiff.dtype)

    # TODO(synk): on v6e/v7x, cast absdiff/s to bf16 and drop to default MXU
    # precision for ~2x; kept f32/HIGHEST here to match the f32 reference.
    dist = jnp.dot(absdiff, s, preferred_element_type=jnp.float32,
                   precision=jax.lax.Precision.HIGHEST)          # (TJ*TI, B)

    e = jnp.exp(-dist).reshape(tj, ti, B_dim)                    # (TJ, TI, B)

    if n_total != n_valid:
        # Mask contributions from batch-padding rows (only exists when N was
        # padded up to a sublane-aligned tile).
        jj = jax.lax.broadcasted_iota(jnp.int32, (tj, ti, B_dim), 0)
        e = jnp.where(j * tj + jj < n_valid, e, 0.0)

    acc_ref[...] += jnp.sum(e, axis=0)                           # (TI, B)

    @pl.when(j == pl.num_programs(1) - 1)
    def _():
        o_ref[...] = acc_ref[...]                                # single block store


def minibatch_discriminator(inp, T, B_dim, C_dim):
    """JAX/Pallas equivalent of the PyTorch minibatch_discriminator.forward."""
    N, C, H, W = inp.shape
    assert (H, W) == (4, 4), "module assumes 4x4 spatial maps"
    K = C * H * W
    BC = B_dim * C_dim
    assert T.shape == (K, BC)
    assert B_dim % 16 == 0, "B_dim must be divisible by 16 for the (N,-1,4,4) view"

    # Batch tiling: pad N up to a multiple of 8 sublanes; tile i and j identically.
    tile = min(_MAX_TILE, _round_up(N, 8))
    n_pad = _round_up(N, tile)

    x = inp.reshape(N, K)                                # keep caller's dtype (no forced f32)
    if n_pad > N:
        x = jnp.concatenate([x, jnp.zeros((n_pad - N, K), x.dtype)], axis=0)

    # ---- Pass 1: M = x @ T ------------------------------------------------
    m = pl.pallas_call(
        _project_kernel,
        out_shape=jax.ShapeDtypeStruct((n_pad, BC), jnp.float32),
        grid=(n_pad // tile,),
        in_specs=[
            pl.BlockSpec((tile, K), lambda i: (i, 0)),
            pl.BlockSpec((K, BC), lambda i: (0, 0)),
        ],
        out_specs=pl.BlockSpec((tile, BC), lambda i: (i, 0)),
        compiler_params=pltpu.CompilerParams(
            dimension_semantics=("parallel",)),
    )(x, T)

    # ---- Pass 2: pairwise L1 + exp + batch reduction ----------------------
    kernel = functools.partial(_pairwise_kernel, B_dim=B_dim, C_dim=C_dim,
                               n_valid=N, n_total=n_pad)
    feats = pl.pallas_call(
        kernel,
        out_shape=jax.ShapeDtypeStruct((n_pad, B_dim), jnp.float32),
        grid=(n_pad // tile, n_pad // tile),
        in_specs=[
            pl.BlockSpec((tile, BC), lambda i, j: (i, 0)),   # M rows of this output tile
            pl.BlockSpec((tile, BC), lambda i, j: (j, 0)),   # M rows being reduced over
        ],
        out_specs=pl.BlockSpec((tile, B_dim), lambda i, j: (i, 0)),
        scratch_shapes=[pltpu.VMEM((tile, B_dim), jnp.float32)],
        compiler_params=pltpu.CompilerParams(
            dimension_semantics=("parallel", "arbitrary"),
            vmem_limit_bytes=48 * 1024 * 1024),
    )(m, m)

    feats = feats[:N].reshape(N, B_dim // 16, 4, 4).astype(inp.dtype)
    return jnp.concatenate([inp, feats], axis=1)


def _reference(inp, T, B_dim, C_dim):
    """Pure-JAX mirror of the PyTorch forward (for verification)."""
    N = inp.shape[0]
    x = inp.reshape(N, -1)
    M = jnp.dot(x, T, precision=jax.lax.Precision.HIGHEST).reshape(N, B_dim, C_dim)
    op1 = M[:, :, :, None]                           # (N, B, C, 1)
    op2 = jnp.transpose(M, (1, 2, 0))[None]          # (1, B, C, N)
    out = jnp.sum(jnp.abs(op1 - op2), axis=2)        # (N, B, N)
    out = jnp.sum(jnp.exp(-out), axis=2)             # (N, B)
    out = out.reshape(N, -1, 4, 4)
    return jnp.concatenate([inp, out], axis=1)


if __name__ == "__main__":
    N, num_channels, B_dim, C_dim = 2, 4, 32, 8

    key = jax.random.PRNGKey(0)
    k_inp, k_t = jax.random.split(key)
    inp = jax.random.normal(k_inp, (N, num_channels, 4, 4), dtype=jnp.float32)
    # T_init = randn(num_channels*4*4, B_dim*C_dim) * 0.1 (deterministic, in-script)
    T = jax.random.normal(k_t, (num_channels * 4 * 4, B_dim * C_dim),
                          dtype=jnp.float32) * 0.1

    out = minibatch_discriminator(inp, T, B_dim, C_dim)
    out = jax.block_until_ready(out)

    expected = _reference(inp, T, B_dim, C_dim)
    assert out.shape == (N, num_channels + B_dim // 16, 4, 4), out.shape
    assert jnp.allclose(out, expected, atol=1e-4, rtol=1e-4), "mismatch vs reference"

    print("KERNEL_OK")
</pallas_src>

<mosaic_0001>
module attributes {stable_mosaic.version = 11 : i64} {
  func.func @_project_kernel(%arg0: i32, %arg1: memref<8x64xf32, #tpu.memory_space<vmem>>, %arg2: memref<64x256xf32, #tpu.memory_space<vmem>>, %arg3: memref<8x256xf32, #tpu.memory_space<vmem>>) attributes {dimension_semantics = [#tpu.dimension_semantics<parallel>], iteration_bounds = array<i64: 1>, scalar_prefetch = 0 : i64, scratch_operands = 0 : i64, tpu.core_type = #tpu.core_type<tc>, window_params = [{transform_indices = @transform_0, window_bounds = array<i64: 8, 64>}, {pipeline_mode = #tpu.pipeline_mode<synchronous>, transform_indices = @transform_1, window_bounds = array<i64: 64, 256>}, {transform_indices = @transform_2, window_bounds = array<i64: 8, 256>}]} {
    %c0 = arith.constant 0 : index
    %c0_0 = arith.constant 0 : index
    %0 = vector.load %arg1[%c0, %c0_0] : memref<8x64xf32, #tpu.memory_space<vmem>>, vector<8x64xf32>
    %c0_1 = arith.constant 0 : index
    %c0_2 = arith.constant 0 : index
    %1 = vector.load %arg2[%c0_1, %c0_2] : memref<64x256xf32, #tpu.memory_space<vmem>>, vector<64x256xf32>
    %cst = arith.constant dense<0.000000e+00> : vector<8x256xf32>
    %2 = tpu.matmul %0, %1, %cst {dimension_numbers = #tpu.dot_dimension_numbers<[1], [0], [0], [1], [0, 0, 1, 1], [], []>, precision = #tpu.contract_precision<fp32>} : vector<8x64xf32>, vector<64x256xf32>, vector<8x256xf32> -> vector<8x256xf32>
    %c0_3 = arith.constant 0 : index
    %c0_4 = arith.constant 0 : index
    %3 = vector.load %arg3[%c0_3, %c0_4] : memref<8x256xf32, #tpu.memory_space<vmem>>, vector<8x256xf32>
    tpu.vector_store %arg3[%c0_3, %c0_4], %2 {strides = array<i32>} : memref<8x256xf32, #tpu.memory_space<vmem>>, vector<8x256xf32>,
    return
  }
  func.func @transform_0(%arg0: i32) -> (i32, i32) {
    %c0_i32 = arith.constant 0 : i32
    %c0_i32_0 = arith.constant 0 : i32
    return %arg0, %c0_i32 : i32, i32
  }
  func.func @transform_1(%arg0: i32) -> (i32, i32) {
    %c0_i32 = arith.constant 0 : i32
    %c0_i32_0 = arith.constant 0 : i32
    %c0_i32_1 = arith.constant 0 : i32
    return %c0_i32, %c0_i32_0 : i32, i32
  }
  func.func @transform_2(%arg0: i32) -> (i32, i32) {
    %c0_i32 = arith.constant 0 : i32
    %c0_i32_0 = arith.constant 0 : i32
    return %arg0, %c0_i32 : i32, i32
  }
}

</mosaic_0001>

<llo_original>
// kernel: tpu_custom_call.1
$region0: #{tpu_custom_call.1}
  #allocation0 [shape = 'u32[]', space=smem, size = 0x4, offset = 0x4, fixed_abs, tag = 'smem constant byte address 0x4 - core index']
  #allocation1 [shape = 'u32[72,128]{1,0:T(1,128)}', space=vmem, size = 0x9000, scoped, tag = 'internal scratch']
  %s0 = inlined_call_operand.hbm [shape: f32[8,64], index: 0, kind: input, shape index: {}]
  %s1 = inlined_call_operand.hbm [shape: f32[64,256], index: 1, kind: input, shape index: {}]
  %s2 = inlined_call_operand.hbm [shape: f32[8,256], index: 2, kind: output, shape index: {}]
  %s3 = sld [smem:[#allocation0]]
  $region26: #{tpu_custom_call.1} parent=0
    _
  %s5 = ssub.s32 1, %s3
  %s6 = scalar_select 0, %s5, %s3
  $region1: #{tpu_custom_call.1} parent=0
    #allocation2 [shape = 'u8[4096]{0}', space=vmem, size = 0x1000, scoped, tag = 'input window, operand 0, single buffered']
    #allocation3 [shape = 's32[1]{0}', space=sflag, size = 0x4, scoped, tag = 'scoped memory for tpu_custom_call.1']
    #allocation4 [shape = 's32[1]{0}', space=sflag, size = 0x4, scoped, tag = 'scoped memory for tpu_custom_call.1']
    #allocation5 [shape = 'u8[65536]{0}', space=vmem, size = 0x10000, scoped, tag = 'input window, operand 1, single buffered']
    #allocation6 [shape = 's32[1]{0}', space=sflag, size = 0x4, scoped, tag = 'scoped memory for tpu_custom_call.1']
    #allocation7 [shape = 'u8[8192]{0}', space=vmem, size = 0x2000, scoped, tag = 'output window, operand 0, single buffered']
    %7 = vsyncpa [#allocation3], 0
    %8 = vsyncpa [#allocation6], 0
    %9 = vsyncpa [#allocation4], 0
    // Predicated region
    $region2: #{tpu_custom_call.1} parent=1 // pred_check
      _
    $region3: #{tpu_custom_call.1} parent=1 // pred_check_branch
      %11 = sbr.rel (0) target = $region5
    $region4: #{tpu_custom_call.1} parent=1 // pred_region
      %13 = vsyncadd [#allocation3], 0
      %s15 = sshll.u32 %s0, 4
      %s16 = int_to_ptr.hbm [resolvable:$true] %s15
      %s17 = sshll.u32 [#allocation2], 4
      %s18 = int_to_ptr.vmem [resolvable:$true] %s17
      %20 = dma.hbm_to_vmem [thread:$0]  %s16, 128, %s18, [#allocation3]
    $region5: #{tpu_custom_call.1} parent=1 // pred_fallthru
      _
    // Predicated region
    $region6: #{tpu_custom_call.1} parent=1 // pred_check
      _
    $region7: #{tpu_custom_call.1} parent=1 // pred_check_branch
      %22 = sbr.rel (0) target = $region9
    $region8: #{tpu_custom_call.1} parent=1 // pred_region
      %24 = vsyncadd [#allocation6], 0
      %s25 = sshll.u32 %s1, 4
      %s26 = int_to_ptr.hbm [resolvable:$true] %s25
      %s27 = sshll.u32 [#allocation5], 4
      %s28 = int_to_ptr.vmem [resolvable:$true] %s27
      %33 = dma.hbm_to_vmem [thread:$0]  %s26, 2048, %s28, [#allocation6], 256, 256, 16
    $region9: #{tpu_custom_call.1} parent=1 // pred_fallthru
      _
    // Predicated region
    $region10: #{tpu_custom_call.1} parent=1 // pred_check
      _
    $region11: #{tpu_custom_call.1} parent=1 // pred_check_branch
      %35 = sbr.rel (0) target = $region13
    $region12: #{tpu_custom_call.1} parent=1 // pred_region
      %37 = dma.done [#allocation3], 128
    $region13: #{tpu_custom_call.1} parent=1 // pred_fallthru
      _
    // Predicated region
    $region14: #{tpu_custom_call.1} parent=1 // pred_check
      _
    $region15: #{tpu_custom_call.1} parent=1 // pred_check_branch
      %39 = sbr.rel (0) target = $region17
    $region16: #{tpu_custom_call.1} parent=1 // pred_region
      %41 = dma.done [#allocation6], 2048
    $region17: #{tpu_custom_call.1} parent=1 // pred_fallthru
      _
    %v42 = vld [vmem:[#allocation2] sm:$0xff]
    %v43 = vld [vmem:[#allocation5] sm:$0xff]
    %v44 = vld [vmem:[#allocation5 + $0x8] sm:$0xff]
    %v45 = vld [vmem:[#allocation5 + $0x10] sm:$0xff]
    %v46 = vld [vmem:[#allocation5 + $0x18] sm:$0xff]
    %v47 = vld [vmem:[#allocation5 + $0x20] sm:$0xff]
    %v48 = vld [vmem:[#allocation5 + $0x28] sm:$0xff]
    %v49 = vld [vmem:[#allocation5 + $0x30] sm:$0xff]
    %v50 = vld [vmem:[#allocation5 + $0x38] sm:$0xff]
    %v51 = vld [vmem:[#allocation5 + $0x40] sm:$0xff]
    %v52 = vld [vmem:[#allocation5 + $0x48] sm:$0xff]
    %v53 = vld [vmem:[#allocation5 + $0x50] sm:$0xff]
    %v54 = vld [vmem:[#allocation5 + $0x58] sm:$0xff]
    %v55 = vld [vmem:[#allocation5 + $0x60] sm:$0xff]
    %v56 = vld [vmem:[#allocation5 + $0x68] sm:$0xff]
    %v57 = vld [vmem:[#allocation5 + $0x70] sm:$0xff]
    %v58 = vld [vmem:[#allocation5 + $0x78] sm:$0xff]
    %vm59 = vcmask 523264
    %v61 = vsel %vm59, %v42, 0
    %63 = vmatpush.msra.mxu0 0.0
    %64 = vmatpush.msra.mxu0 0.0
    %65 = vmatpush.msra.mxu0 0.0
    %66 = vmatpush.msra.mxu0 0.0
    %67 = vmatpush.msra.mxu0 0.0
    %68 = vmatpush.msra.mxu0 0.0
    %69 = vmatpush.msra.mxu0 0.0
    %70 = vmatpush.msra.mxu0 0.0
    %v71 = vand.u32 %v57, 4294901760
    %72 = vmatpush.msra.mxu0 %v71
    %v73 = vand.u32 %v55, 4294901760
    %74 = vmatpush.msra.mxu0 %v73
    %v75 = vand.u32 %v53, 4294901760
    %76 = vmatpush.msra.mxu0 %v75
    %v77 = vand.u32 %v51, 4294901760
    %78 = vmatpush.msra.mxu0 %v77
    %v79 = vand.u32 %v49, 4294901760
    %80 = vmatpush.msra.mxu0 %v79
    %v81 = vand.u32 %v47, 4294901760
    %82 = vmatpush.msra.mxu0 %v81
    %v83 = vand.u32 %v45, 4294901760
    %84 = vmatpush.msra.mxu0 %v83
    %v85 = vand.u32 %v43, 4294901760
    %86 = vmatpush.msra.mxu0 %v85
    %v87 = vand.u32 %v61, 4294901760
    %v88 = vsub.f32 %v61, %v87
    %v89 = vand.u32 %v88, 4294901760
    %v90 = vsub.f32 %v88, %v89
    %v91 = vand.u32 %v90, 4294901760
    %92 = vmatmul.f32.gmra.mxu0 %v91
    %v93 = vpop.f32.mrf.mxu0
    %v94 = vadd.f32 0.0, %v93
    %95 = vdwg.mxu0
    %96 = vmatpush.msra.mxu0 0.0
    %97 = vmatpush.msra.mxu0 0.0
    %98 = vmatpush.msra.mxu0 0.0
    %99 = vmatpush.msra.mxu0 0.0
    %100 = vmatpush.msra.mxu0 0.0
    %101 = vmatpush.msra.mxu0 0.0
    %102 = vmatpush.msra.mxu0 0.0
    %103 = vmatpush.msra.mxu0 0.0
    %v104 = vand.u32 %v57, 4294901760
    %v105 = vsub.f32 %v57, %v104
    %v106 = vand.u32 %v105, 4294901760
    %v107 = vsub.f32 %v105, %v106
    %v108 = vand.u32 %v107, 4294901760
    %109 = vmatpush.msra.mxu0 %v108
    %v110 = vand.u32 %v55, 4294901760
    %v111 = vsub.f32 %v55, %v110
    %v112 = vand.u32 %v111, 4294901760
    %v113 = vsub.f32 %v111, %v112
    %v114 = vand.u32 %v113, 4294901760
    %115 = vmatpush.msra.mxu0 %v114
    %v116 = vand.u32 %v53, 4294901760
    %v117 = vsub.f32 %v53, %v116
    %v118 = vand.u32 %v117, 4294901760
    %v119 = vsub.f32 %v117, %v118
    %v120 = vand.u32 %v119, 4294901760
    %121 = vmatpush.msra.mxu0 %v120
    %v122 = vand.u32 %v51, 4294901760
    %v123 = vsub.f32 %v51, %v122
    %v124 = vand.u32 %v123, 4294901760
    %v125 = vsub.f32 %v123, %v124
    %v126 = vand.u32 %v125, 4294901760
    %127 = vmatpush.msra.mxu0 %v126
    %v128 = vand.u32 %v49, 4294901760
    %v129 = vsub.f32 %v49, %v128
    %v130 = vand.u32 %v129, 4294901760
    %v131 = vsub.f32 %v129, %v130
    %v132 = vand.u32 %v131, 4294901760
    %133 = vmatpush.msra.mxu0 %v132
    %v134 = vand.u32 %v47, 4294901760
    %v135 = vsub.f32 %v47, %v134
    %v136 = vand.u32 %v135, 4294901760
    %v137 = vsub.f32 %v135, %v136
    %v138 = vand.u32 %v137, 4294901760
    %139 = vmatpush.msra.mxu0 %v138
    %v140 = vand.u32 %v45, 4294901760
    %v141 = vsub.f32 %v45, %v140
    %v142 = vand.u32 %v141, 4294901760
    %v143 = vsub.f32 %v141, %v142
    %v144 = vand.u32 %v143, 4294901760
    %145 = vmatpush.msra.mxu0 %v144
    %v146 = vand.u32 %v43, 4294901760
    %v147 = vsub.f32 %v43, %v146
    %v148 = vand.u32 %v147, 4294901760
    %v149 = vsub.f32 %v147, %v148
    %v150 = vand.u32 %v149, 4294901760
    %151 = vmatpush.msra.mxu0 %v150
    %v152 = vand.u32 %v61, 4294901760
    %153 = vmatmul.f32.gmra.mxu0 %v152
    %v154 = vpop.f32.mrf.mxu0
    %v155 = vadd.f32 %v94, %v154
    %156 = vdwg.mxu0
    %157 = vmatpush.msra.mxu0 0.0
    %158 = vmatpush.msra.mxu0 0.0
    %159 = vmatpush.msra.mxu0 0.0
    %160 = vmatpush.msra.mxu0 0.0
    %161 = vmatpush.msra.mxu0 0.0
    %162 = vmatpush.msra.mxu0 0.0
    %163 = vmatpush.msra.mxu0 0.0
    %164 = vmatpush.msra.mxu0 0.0
    %v165 = vand.u32 %v57, 4294901760
    %v166 = vsub.f32 %v57, %v165
    %167 = vmatpush.msra.mxu0 %v166
    %v168 = vand.u32 %v55, 4294901760
    %v169 = vsub.f32 %v55, %v168
    %170 = vmatpush.msra.mxu0 %v169
    %v171 = vand.u32 %v53, 4294901760
    %v172 = vsub.f32 %v53, %v171
    %173 = vmatpush.msra.mxu0 %v172
    %v174 = vand.u32 %v51, 4294901760
    %v175 = vsub.f32 %v51, %v174
    %176 = vmatpush.msra.mxu0 %v175
    %v177 = vand.u32 %v49, 4294901760
    %v178 = vsub.f32 %v49, %v177
    %179 = vmatpush.msra.mxu0 %v178
    %v180 = vand.u32 %v47, 4294901760
    %v181 = vsub.f32 %v47, %v180
    %182 = vmatpush.msra.mxu0 %v181
    %v183 = vand.u32 %v45, 4294901760
    %v184 = vsub.f32 %v45, %v183
    %185 = vmatpush.msra.mxu0 %v184
    %v186 = vand.u32 %v43, 4294901760
    %v187 = vsub.f32 %v43, %v186
    %188 = vmatpush.msra.mxu0 %v187
    %v189 = vand.u32 %v61, 4294901760
    %v190 = vsub.f32 %v61, %v189
    %191 = vmatmul.f32.gmra.mxu0 %v190
    %v192 = vpop.f32.mrf.mxu0
    %v193 = vadd.f32 %v155, %v192
    %194 = vdwg.mxu0
    %195 = vmatpush.msra.mxu0 0.0
    %196 = vmatpush.msra.mxu0 0.0
    %197 = vmatpush.msra.mxu0 0.0
    %198 = vmatpush.msra.mxu0 0.0
    %199 = vmatpush.msra.mxu0 0.0
    %200 = vmatpush.msra.mxu0 0.0
    %201 = vmatpush.msra.mxu0 0.0
    %202 = vmatpush.msra.mxu0 0.0
    %v203 = vand.u32 %v57, 4294901760
    %204 = vmatpush.msra.mxu0 %v203
    %v205 = vand.u32 %v55, 4294901760
    %206 = vmatpush.msra.mxu0 %v205
    %v207 = vand.u32 %v53, 4294901760
    %208 = vmatpush.msra.mxu0 %v207
    %v209 = vand.u32 %v51, 4294901760
    %210 = vmatpush.msra.mxu0 %v209
    %v211 = vand.u32 %v49, 4294901760
    %212 = vmatpush.msra.mxu0 %v211
    %v213 = vand.u32 %v47, 4294901760
    %214 = vmatpush.msra.mxu0 %v213
    %v215 = vand.u32 %v45, 4294901760
    %216 = vmatpush.msra.mxu0 %v215
    %v217 = vand.u32 %v43, 4294901760
    %218 = vmatpush.msra.mxu0 %v217
    %v219 = vand.u32 %v61, 4294901760
    %v220 = vsub.f32 %v61, %v219
    %v221 = vand.u32 %v220, 4294901760
    %222 = vmatmul.f32.gmra.mxu0 %v221
    %v223 = vpop.f32.mrf.mxu0
    %v224 = vadd.f32 %v193, %v223
    %225 = vdwg.mxu0
    %226 = vmatpush.msra.mxu0 0.0
    %227 = vmatpush.msra.mxu0 0.0
    %228 = vmatpush.msra.mxu0 0.0
    %229 = vmatpush.msra.mxu0 0.0
    %230 = vmatpush.msra.mxu0 0.0
    %231 = vmatpush.msra.mxu0 0.0
    %232 = vmatpush.msra.mxu0 0.0
    %233 = vmatpush.msra.mxu0 0.0
    %v234 = vand.u32 %v57, 4294901760
    %v235 = vsub.f32 %v57, %v234
    %v236 = vand.u32 %v235, 4294901760
    %237 = vmatpush.msra.mxu0 %v236
    %v238 = vand.u32 %v55, 4294901760
    %v239 = vsub.f32 %v55, %v238
    %v240 = vand.u32 %v239, 4294901760
    %241 = vmatpush.msra.mxu0 %v240
    %v242 = vand.u32 %v53, 4294901760
    %v243 = vsub.f32 %v53, %v242
    %v244 = vand.u32 %v243, 4294901760
    %245 = vmatpush.msra.mxu0 %v244
    %v246 = vand.u32 %v51, 4294901760
    %v247 = vsub.f32 %v51, %v246
    %v248 = vand.u32 %v247, 4294901760
    %249 = vmatpush.msra.mxu0 %v248
    %v250 = vand.u32 %v49, 4294901760
    %v251 = vsub.f32 %v49, %v250
    %v252 = vand.u32 %v251, 4294901760
    %253 = vmatpush.msra.mxu0 %v252
    %v254 = vand.u32 %v47, 4294901760
    %v255 = vsub.f32 %v47, %v254
    %v256 = vand.u32 %v255, 4294901760
    %257 = vmatpush.msra.mxu0 %v256
    %v258 = vand.u32 %v45, 4294901760
    %v259 = vsub.f32 %v45, %v258
    %v260 = vand.u32 %v259, 4294901760
    %261 = vmatpush.msra.mxu0 %v260
    %v262 = vand.u32 %v43, 4294901760
    %v263 = vsub.f32 %v43, %v262
    %v264 = vand.u32 %v263, 4294901760
    %265 = vmatpush.msra.mxu0 %v264
    %v266 = vand.u32 %v61, 4294901760
    %267 = vmatmul.f32.gmra.mxu0 %v266
    %v268 = vpop.f32.mrf.mxu0
    %v269 = vadd.f32 %v224, %v268
    %270 = vdwg.mxu0
    %271 = vmatpush.msra.mxu0 0.0
    %272 = vmatpush.msra.mxu0 0.0
    %273 = vmatpush.msra.mxu0 0.0
    %274 = vmatpush.msra.mxu0 0.0
    %275 = vmatpush.msra.mxu0 0.0
    %276 = vmatpush.msra.mxu0 0.0
    %277 = vmatpush.msra.mxu0 0.0
    %278 = vmatpush.msra.mxu0 0.0
    %v279 = vand.u32 %v57, 4294901760
    %280 = vmatpush.msra.mxu0 %v279
    %v281 = vand.u32 %v55, 4294901760
    %282 = vmatpush.msra.mxu0 %v281
    %v283 = vand.u32 %v53, 4294901760
    %284 = vmatpush.msra.mxu0 %v283
    %v285 = vand.u32 %v51, 4294901760
    %286 = vmatpush.msra.mxu0 %v285
    %v287 = vand.u32 %v49, 4294901760
    %288 = vmatpush.msra.mxu0 %v287
    %v289 = vand.u32 %v47, 4294901760
    %290 = vmatpush.msra.mxu0 %v289
    %v291 = vand.u32 %v45, 4294901760
    %292 = vmatpush.msra.mxu0 %v291
    %v293 = vand.u32 %v43, 4294901760
    %294 = vmatpush.msra.mxu0 %v293
    %v295 = vand.u32 %v61, 4294901760
    %296 = vmatmul.f32.gmra.mxu0 %v295
    %v297 = vpop.f32.mrf.mxu0
    %v298 = vadd.f32 %v269, %v297
    %299 = vdwg.mxu0
    %300 = vmatpush.msra.mxu0 0.0
    %301 = vmatpush.msra.mxu0 0.0
    %302 = vmatpush.msra.mxu0 0.0
    %303 = vmatpush.msra.mxu0 0.0
    %304 = vmatpush.msra.mxu0 0.0
    %305 = vmatpush.msra.mxu0 0.0
    %306 = vmatpush.msra.mxu0 0.0
    %307 = vmatpush.msra.mxu0 0.0
    %v308 = vand.u32 %v58, 4294901760
    %309 = vmatpush.msra.mxu0 %v308
    %v310 = vand.u32 %v56, 4294901760
    %311 = vmatpush.msra.mxu0 %v310
    %v312 = vand.u32 %v54, 4294901760
    %313 = vmatpush.msra.mxu0 %v312
    %v314 = vand.u32 %v52, 4294901760
    %315 = vmatpush.msra.mxu0 %v314
    %v316 = vand.u32 %v50, 4294901760
    %317 = vmatpush.msra.mxu0 %v316
    %v318 = vand.u32 %v48, 4294901760
    %319 = vmatpush.msra.mxu0 %v318
    %v320 = vand.u32 %v46, 4294901760
    %321 = vmatpush.msra.mxu0 %v320
    %v322 = vand.u32 %v44, 4294901760
    %323 = vmatpush.msra.mxu0 %v322
    %v324 = vand.u32 %v61, 4294901760
    %v325 = vsub.f32 %v61, %v324
    %v326 = vand.u32 %v325, 4294901760
    %v327 = vsub.f32 %v325, %v326
    %v328 = vand.u32 %v327, 4294901760
    %329 = vmatmul.f32.gmra.mxu0 %v328
    %v330 = vpop.f32.mrf.mxu0
    %v331 = vadd.f32 0.0, %v330
    %332 = vdwg.mxu0
    %333 = vmatpush.msra.mxu0 0.0
    %334 = vmatpush.msra.mxu0 0.0
    %335 = vmatpush.msra.mxu0 0.0
    %336 = vmatpush.msra.mxu0 0.0
    %337 = vmatpush.msra.mxu0 0.0
    %338 = vmatpush.msra.mxu0 0.0
    %339 = vmatpush.msra.mxu0 0.0
    %340 = vmatpush.msra.mxu0 0.0
    %v341 = vand.u32 %v58, 4294901760
    %v342 = vsub.f32 %v58, %v341
    %v343 = vand.u32 %v342, 4294901760
    %v344 = vsub.f32 %v342, %v343
    %v345 = vand.u32 %v344, 4294901760
    %346 = vmatpush.msra.mxu0 %v345
    %v347 = vand.u32 %v56, 4294901760
    %v348 = vsub.f32 %v56, %v347
    %v349 = vand.u32 %v348, 4294901760
    %v350 = vsub.f32 %v348, %v349
    %v351 = vand.u32 %v350, 4294901760
    %352 = vmatpush.msra.mxu0 %v351
    %v353 = vand.u32 %v54, 4294901760
    %v354 = vsub.f32 %v54, %v353
    %v355 = vand.u32 %v354, 4294901760
    %v356 = vsub.f32 %v354, %v355
    %v357 = vand.u32 %v356, 4294901760
    %358 = vmatpush.msra.mxu0 %v357
    %v359 = vand.u32 %v52, 4294901760
    %v360 = vsub.f32 %v52, %v359
    %v361 = vand.u32 %v360, 4294901760
    %v362 = vsub.f32 %v360, %v361
    %v363 = vand.u32 %v362, 4294901760
    %364 = vmatpush.msra.mxu0 %v363
    %v365 = vand.u32 %v50, 4294901760
    %v366 = vsub.f32 %v50, %v365
    %v367 = vand.u32 %v366, 4294901760
    %v368 = vsub.f32 %v366, %v367
    %v369 = vand.u32 %v368, 4294901760
    %370 = vmatpush.msra.mxu0 %v369
    %v371 = vand.u32 %v48, 4294901760
    %v372 = vsub.f32 %v48, %v371
    %v373 = vand.u32 %v372, 4294901760
    %v374 = vsub.f32 %v372, %v373
    %v375 = vand.u32 %v374, 4294901760
    %376 = vmatpush.msra.mxu0 %v375
    %v377 = vand.u32 %v46, 4294901760
    %v378 = vsub.f32 %v46, %v377
    %v379 = vand.u32 %v378, 4294901760
    %v380 = vsub.f32 %v378, %v379
    %v381 = vand.u32 %v380, 4294901760
    %382 = vmatpush.msra.mxu0 %v381
    %v383 = vand.u32 %v44, 4294901760
    %v384 = vsub.f32 %v44, %v383
    %v385 = vand.u32 %v384, 4294901760
    %v386 = vsub.f32 %v384, %v385
    %v387 = vand.u32 %v386, 4294901760
    %388 = vmatpush.msra.mxu0 %v387
    %v389 = vand.u32 %v61, 4294901760
    %390 = vmatmul.f32.gmra.mxu0 %v389
    %v391 = vpop.f32.mrf.mxu0
    %v392 = vadd.f32 %v331, %v391
    %393 = vdwg.mxu0
    %394 = vmatpush.msra.mxu0 0.0
    %395 = vmatpush.msra.mxu0 0.0
    %396 = vmatpush.msra.mxu0 0.0
    %397 = vmatpush.msra.mxu0 0.0
    %398 = vmatpush.msra.mxu0 0.0
    %399 = vmatpush.msra.mxu0 0.0
    %400 = vmatpush.msra.mxu0 0.0
    %401 = vmatpush.msra.mxu0 0.0
    %v402 = vand.u32 %v58, 4294901760
    %v403 = vsub.f32 %v58, %v402
    %404 = vmatpush.msra.mxu0 %v403
    %v405 = vand.u32 %v56, 4294901760
    %v406 = vsub.f32 %v56, %v405
    %407 = vmatpush.msra.mxu0 %v406
    %v408 = vand.u32 %v54, 4294901760
    %v409 = vsub.f32 %v54, %v408
    %410 = vmatpush.msra.mxu0 %v409
    %v411 = vand.u32 %v52, 4294901760
    %v412 = vsub.f32 %v52, %v411
    %413 = vmatpush.msra.mxu0 %v412
    %v414 = vand.u32 %v50, 4294901760
    %v415 = vsub.f32 %v50, %v414
    %416 = vmatpush.msra.mxu0 %v415
    %v417 = vand.u32 %v48, 4294901760
    %v418 = vsub.f32 %v48, %v417
    %419 = vmatpush.msra.mxu0 %v418
    %v420 = vand.u32 %v46, 4294901760
    %v421 = vsub.f32 %v46, %v420
    %422 = vmatpush.msra.mxu0 %v421
    %v423 = vand.u32 %v44, 4294901760
    %v424 = vsub.f32 %v44, %v423
    %425 = vmatpush.msra.mxu0 %v424
    %v426 = vand.u32 %v61, 4294901760
    %v427 = vsub.f32 %v61, %v426
    %428 = vmatmul.f32.gmra.mxu0 %v427
    %v429 = vpop.f32.mrf.mxu0
    %v430 = vadd.f32 %v392, %v429
    %431 = vdwg.mxu0
    %432 = vmatpush.msra.mxu0 0.0
    %433 = vmatpush.msra.mxu0 0.0
    %434 = vmatpush.msra.mxu0 0.0
    %435 = vmatpush.msra.mxu0 0.0
    %436 = vmatpush.msra.mxu0 0.0
    %437 = vmatpush.msra.mxu0 0.0
    %438 = vmatpush.msra.mxu0 0.0
    %439 = vmatpush.msra.mxu0 0.0
    %v440 = vand.u32 %v58, 4294901760
    %441 = vmatpush.msra.mxu0 %v440
    %v442 = vand.u32 %v56, 4294901760
    %443 = vmatpush.msra.mxu0 %v442
    %v444 = vand.u32 %v54, 4294901760
    %445 = vmatpush.msra.mxu0 %v444
    %v446 = vand.u32 %v52, 4294901760
    %447 = vmatpush.msra.mxu0 %v446
    %v448 = vand.u32 %v50, 4294901760
    %449 = vmatpush.msra.mxu0 %v448
    %v450 = vand.u32 %v48, 4294901760
    %451 = vmatpush.msra.mxu0 %v450
    %v452 = vand.u32 %v46, 4294901760
    %453 = vmatpush.msra.mxu0 %v452
    %v454 = vand.u32 %v44, 4294901760
    %455 = vmatpush.msra.mxu0 %v454
    %v456 = vand.u32 %v61, 4294901760
    %v457 = vsub.f32 %v61, %v456
    %v458 = vand.u32 %v457, 4294901760
    %459 = vmatmul.f32.gmra.mxu0 %v458
    %v460 = vpop.f32.mrf.mxu0
    %v461 = vadd.f32 %v430, %v460
    %462 = vdwg.mxu0
    %463 = vmatpush.msra.mxu0 0.0
    %464 = vmatpush.msra.mxu0 0.0
    %465 = vmatpush.msra.mxu0 0.0
    %466 = vmatpush.msra.mxu0 0.0
    %467 = vmatpush.msra.mxu0 0.0
    %468 = vmatpush.msra.mxu0 0.0
    %469 = vmatpush.msra.mxu0 0.0
    %470 = vmatpush.msra.mxu0 0.0
    %v471 = vand.u32 %v58, 4294901760
    %v472 = vsub.f32 %v58, %v471
    %v473 = vand.u32 %v472, 4294901760
    %474 = vmatpush.msra.mxu0 %v473
    %v475 = vand.u32 %v56, 4294901760
    %v476 = vsub.f32 %v56, %v475
    %v477 = vand.u32 %v476, 4294901760
    %478 = vmatpush.msra.mxu0 %v477
    %v479 = vand.u32 %v54, 4294901760
    %v480 = vsub.f32 %v54, %v479
    %v481 = vand.u32 %v480, 4294901760
    %482 = vmatpush.msra.mxu0 %v481
    %v483 = vand.u32 %v52, 4294901760
    %v484 = vsub.f32 %v52, %v483
    %v485 = vand.u32 %v484, 4294901760
    %486 = vmatpush.msra.mxu0 %v485
    %v487 = vand.u32 %v50, 4294901760
    %v488 = vsub.f32 %v50, %v487
    %v489 = vand.u32 %v488, 4294901760
    %490 = vmatpush.msra.mxu0 %v489
    %v491 = vand.u32 %v48, 4294901760
    %v492 = vsub.f32 %v48, %v491
    %v493 = vand.u32 %v492, 4294901760
    %494 = vmatpush.msra.mxu0 %v493
    %v495 = vand.u32 %v46, 4294901760
    %v496 = vsub.f32 %v46, %v495
    %v497 = vand.u32 %v496, 4294901760
    %498 = vmatpush.msra.mxu0 %v497
    %v499 = vand.u32 %v44, 4294901760
    %v500 = vsub.f32 %v44, %v499
    %v501 = vand.u32 %v500, 4294901760
    %502 = vmatpush.msra.mxu0 %v501
    %v503 = vand.u32 %v61, 4294901760
    %504 = vmatmul.f32.gmra.mxu0 %v503
    %v505 = vpop.f32.mrf.mxu0
    %v506 = vadd.f32 %v461, %v505
    %507 = vdwg.mxu0
    %508 = vmatpush.msra.mxu0 0.0
    %509 = vmatpush.msra.mxu0 0.0
    %510 = vmatpush.msra.mxu0 0.0
    %511 = vmatpush.msra.mxu0 0.0
    %512 = vmatpush.msra.mxu0 0.0
    %513 = vmatpush.msra.mxu0 0.0
    %514 = vmatpush.msra.mxu0 0.0
    %515 = vmatpush.msra.mxu0 0.0
    %v516 = vand.u32 %v58, 4294901760
    %517 = vmatpush.msra.mxu0 %v516
    %v518 = vand.u32 %v56, 4294901760
    %519 = vmatpush.msra.mxu0 %v518
    %v520 = vand.u32 %v54, 4294901760
    %521 = vmatpush.msra.mxu0 %v520
    %v522 = vand.u32 %v52, 4294901760
    %523 = vmatpush.msra.mxu0 %v522
    %v524 = vand.u32 %v50, 4294901760
    %525 = vmatpush.msra.mxu0 %v524
    %v526 = vand.u32 %v48, 4294901760
    %527 = vmatpush.msra.mxu0 %v526
    %v528 = vand.u32 %v46, 4294901760
    %529 = vmatpush.msra.mxu0 %v528
    %v530 = vand.u32 %v44, 4294901760
    %531 = vmatpush.msra.mxu0 %v530
    %v532 = vand.u32 %v61, 4294901760
    %533 = vmatmul.f32.gmra.mxu0 %v532
    %v534 = vpop.f32.mrf.mxu0
    %v535 = vadd.f32 %v506, %v534
    %536 = vdwg.mxu0
    %537 = vst [vmem:[#allocation7] sm:$0xff] %v298
    %538 = vst [vmem:[#allocation7 + $0x8] sm:$0xff] %v535
    // Predicated region
    $region18: #{tpu_custom_call.1} parent=1 // pred_check
      _
    $region19: #{tpu_custom_call.1} parent=1 // pred_check_branch
      %540 = sbr.rel (0) target = $region21
    $region20: #{tpu_custom_call.1} parent=1 // pred_region
      %542 = vsyncadd [#allocation4], 0
      %s544 = sshll.u32 [#allocation7], 4
      %s545 = int_to_ptr.vmem [resolvable:$true] %s544
      %s546 = sshll.u32 %s2, 4
      %s547 = int_to_ptr.hbm [resolvable:$true] %s546
      %549 = dma.vmem_to_hbm [thread:$0]  %s545, 256, %s547, [#allocation4]
    $region21: #{tpu_custom_call.1} parent=1 // pred_fallthru
      _
    // Predicated region
    $region22: #{tpu_custom_call.1} parent=1 // pred_check
      _
    $region23: #{tpu_custom_call.1} parent=1 // pred_check_branch
      %551 = sbr.rel (0) target = $region25
    $region24: #{tpu_custom_call.1} parent=1 // pred_region
      %553 = dma.done [#allocation4], 256
    $region25: #{tpu_custom_call.1} parent=1 // pred_fallthru
      _
    %554 = vsyncpa [#allocation3], 1
    %555 = vsyncpa [#allocation6], 1
    %556 = vsyncpa [#allocation4], 1

</llo_original>
